<compile_context>
chip_gen: v7x
topology: tpu7x:2x2x1
jax: 0.10.0
libtpu: 0.0.40
codegen_flags: <defaults>
</compile_context>

<pallas_src>
import jax
import jax.numpy as jnp
from jax.experimental import pallas as pl
from jax.experimental.pallas import tpu as pltpu


def _shuffle_copy_kernel(x_ref, o_ref):
    # Input and output tiles hold the same elements in the same row-major
    # order (the permutation is done by the index_maps), so this reshape is a
    # free, relayout-less copy.
    o_ref[...] = x_ref[...].reshape(o_ref.shape)


def channel_shuffle(x, g):
    """ShuffleNet channel shuffle (NCHW) implemented as a Pallas TPU kernel."""
    B, C, H, W = x.shape
    assert C % g == 0, "C must be divisible by g"
    cpg = C // g                      # channels per group
    HW = H * W
    itemsize = jnp.dtype(x.dtype).itemsize

    if g == 1:
        return x                      # identity permutation

    cost = pl.CostEstimate(flops=0, transcendentals=0,
                           bytes_accessed=2 * B * C * HW * itemsize)
    cparams = pltpu.CompilerParams(
        dimension_semantics=("parallel", "parallel"))

    if HW % 128 == 0:
        # ---------------- lane-dense fast path ----------------------------
        # input  viewed as (B, g,  cpg, HW): one contiguous (cpg, HW) slab
        #                                    per (batch, group) grid step.
        # output viewed as (B, cpg, g*HW):   that slab lands at lane offset
        #                                    k*HW of every output row, so the
        #                                    output last dim is a large
        #                                    multiple of 128 (unmasked vst).
        x_in = x.reshape(B, g, cpg, HW)                      # free reshape
        out = pl.pallas_call(
            _shuffle_copy_kernel,
            out_shape=jax.ShapeDtypeStruct((B, cpg, g * HW), x.dtype),
            grid=(B, g),
            in_specs=[pl.BlockSpec((1, 1, cpg, HW),
                                   lambda b, k: (b, k, 0, 0))],
            out_specs=pl.BlockSpec((1, cpg, HW),
                                   lambda b, k: (b, 0, k)),
            compiler_params=cparams,
            cost_estimate=cost,
        )(x_in)
        return out.reshape(B, C, H, W)                       # free reshape

    # ---------------- general fallback (HW not a multiple of 128) --------
    # Keep (H, W) as the last two dims so every block uses full-extent
    # last-two dims; the permuted channel axes sit in unconstrained
    # leading positions.
    x_in = x.reshape(B, g, cpg, H, W)                        # free reshape
    out = pl.pallas_call(
        _shuffle_copy_kernel,
        out_shape=jax.ShapeDtypeStruct((B, cpg, g, H, W), x.dtype),
        grid=(B, g),
        in_specs=[pl.BlockSpec((1, 1, cpg, H, W),
                               lambda b, k: (b, k, 0, 0, 0))],
        out_specs=pl.BlockSpec((1, cpg, 1, H, W),
                               lambda b, k: (b, 0, k, 0, 0)),
        compiler_params=cparams,
        cost_estimate=cost,
    )(x_in)
    return out.reshape(B, C, H, W)                           # free reshape


def channel_shuffle_ref(x, g):
    # Pure-JAX reference mirroring the PyTorch view/permute/view chain.
    B, C, H, W = x.shape
    return (
        x.reshape(B, g, C // g, H, W)
        .transpose(0, 2, 1, 3, 4)
        .reshape(B, C, H, W)
    )


if __name__ == "__main__":
    key = jax.random.PRNGKey(0)

    # Test 1: small shape consistent with the module (lane-dense path).
    B, C, H, W = 2, 4, 16, 16
    g = 2
    x = jax.random.normal(key, (B, C, H, W), dtype=jnp.float32)
    y = jax.block_until_ready(channel_shuffle(x, g))
    y_ref = channel_shuffle_ref(x, g)
    assert y.shape == (B, C, H, W)
    assert y.dtype == x.dtype
    assert jnp.array_equal(y, y_ref), "Pallas channel shuffle mismatch (fast path)"

    # Test 2: ShuffleNet-style 7x7 spatial (HW not a multiple of 128 -> fallback).
    B2, C2, H2, W2 = 2, 6, 7, 7
    g2 = 3
    x2 = jax.random.normal(jax.random.PRNGKey(1), (B2, C2, H2, W2),
                           dtype=jnp.float32)
    y2 = jax.block_until_ready(channel_shuffle(x2, g2))
    y2_ref = channel_shuffle_ref(x2, g2)
    assert jnp.array_equal(y2, y2_ref), "Pallas channel shuffle mismatch (fallback)"

    print("KERNEL_OK")
</pallas_src>

<mosaic_0001>
module attributes {stable_mosaic.version = 11 : i64} {
  func.func @_shuffle_copy_kernel(%arg0: i32, %arg1: i32, %arg2: memref<1x1x2x256xf32, #tpu.memory_space<vmem>>, %arg3: memref<1x2x256xf32, #tpu.memory_space<vmem>>) attributes {dimension_semantics = [#tpu.dimension_semantics<parallel>, #tpu.dimension_semantics<parallel>], iteration_bounds = array<i64: 2, 2>, scalar_prefetch = 0 : i64, scratch_operands = 0 : i64, tpu.core_type = #tpu.core_type<tc>, window_params = [{transform_indices = @transform_0, window_bounds = array<i64: 1, 1, 2, 256>}, {transform_indices = @transform_1, window_bounds = array<i64: 1, 2, 256>}]} {
    %c0 = arith.constant 0 : index
    %c0_0 = arith.constant 0 : index
    %c0_1 = arith.constant 0 : index
    %c0_2 = arith.constant 0 : index
    %0 = vector.load %arg2[%c0, %c0_0, %c0_1, %c0_2] : memref<1x1x2x256xf32, #tpu.memory_space<vmem>>, vector<1x1x2x256xf32>
    %1 = vector.shape_cast %0 : vector<1x1x2x256xf32> to vector<1x2x256xf32>
    %c0_3 = arith.constant 0 : index
    %c0_4 = arith.constant 0 : index
    %c0_5 = arith.constant 0 : index
    %2 = vector.load %arg3[%c0_3, %c0_4, %c0_5] : memref<1x2x256xf32, #tpu.memory_space<vmem>>, vector<1x2x256xf32>
    tpu.vector_store %arg3[%c0_3, %c0_4, %c0_5], %1 {strides = array<i32>} : memref<1x2x256xf32, #tpu.memory_space<vmem>>, vector<1x2x256xf32>,
    return
  }
  func.func @transform_0(%arg0: i32, %arg1: i32) -> (i32, i32, i32, i32) {
    %c0_i32 = arith.constant 0 : i32
    %c0_i32_0 = arith.constant 0 : i32
    %c0_i32_1 = arith.constant 0 : i32
    return %arg0, %arg1, %c0_i32, %c0_i32_0 : i32, i32, i32, i32
  }
  func.func @transform_1(%arg0: i32, %arg1: i32) -> (i32, i32, i32) {
    %c0_i32 = arith.constant 0 : i32
    %c0_i32_0 = arith.constant 0 : i32
    return %arg0, %c0_i32, %arg1 : i32, i32, i32
  }
}

</mosaic_0001>

<llo_original>
// kernel: tpu_custom_call.1
$region0: #{tpu_custom_call.1}
  #allocation0 [shape = 'u32[]', space=smem, size = 0x4, offset = 0x4, fixed_abs, tag = 'smem constant byte address 0x4 - core index']
  #allocation1 [shape = 'u32[144,128]{1,0:T(1,128)}', space=vmem, size = 0x12000, scoped, tag = 'internal scratch']
  %s0 = inlined_call_operand.hbm [shape: f32[2,2,2,256], index: 0, kind: input, shape index: {}]
  %s1 = inlined_call_operand.hbm [shape: f32[2,2,512], index: 1, kind: output, shape index: {}]
  %s2 = sld [smem:[#allocation0]]
  $region41: #{tpu_custom_call.1} parent=0
    _
  %s4 = ssub.s32 1, %s2
  %s5 = scalar_select 0, %s4, %s2
  $region1: #{tpu_custom_call.1} parent=0
    #allocation2 [shape = 'u8[4096]{0}', space=vmem, size = 0x1000, scoped, tag = 'input window, operand 0']
    #allocation3 [shape = 's32[2]{0}', space=sflag, size = 0x8, scoped, tag = 'scoped memory for tpu_custom_call.1']
    #allocation4 [shape = 's32[2]{0}', space=sflag, size = 0x8, scoped, tag = 'scoped memory for tpu_custom_call.1']
    #allocation5 [shape = 'u8[4096]{0}', space=vmem, size = 0x1000, scoped, tag = 'output window, operand 0']
    %6 = vsyncpa [#allocation3], 0
    %s7 = scalar_lea.sflag [#allocation3], 1
    %8 = vsyncpa %s7, 0
    %9 = vsyncpa [#allocation4], 0
    %s10 = scalar_lea.sflag [#allocation4], 1
    %11 = vsyncpa %s10, 0
    loop: start=0, step=1, limit=6
    $region2: #{tpu_custom_call.1} parent=1 // loop_pre_header
      _
    $region3: #{tpu_custom_call.1} parent=1 // loop_header
      %s13 = sphi 0, %s17
      %p14 = scmp.ge.s32.totalorder %s13, 6
      %s20 = sphi 0, %s32
      %s21 = sphi 0, %s28
      %s22 = sphi 0, %s20
      %s23 = sphi 0, %s21
      %s24 = sphi 0, %s22
      %s25 = sphi 0, %s23
      %s37 = sphi 0, %s39
      %s40 = sphi 0, %s37
      %s41 = sphi 0, %s40
      %s57 = sphi 0, %s41
      %s65 = sphi 0, %s67
      %s68 = sphi 0, %s65
      %s69 = sphi 0, %s68
      %s85 = sphi 0, %s69
    $region4: #{tpu_custom_call.1} parent=1 // loop_header_branch
      %16 = sbr.rel (%p14) target = $region8
    $region5: #{tpu_custom_call.1} parent=1 // loop_body
      %s18 = ssub.s32 %s13, 1
      %s19 = ssub.s32 %s13, 2
      %s26 = sadd.s32 1, %s21
      %p27 = scmp.ge.s32.totalorder %s26, 2
      %s28 = scalar_select %p27, 0, %s26
      %s29 = sadd.s32 1, %s20
      %s30 = scalar_select %p27, %s29, %s20
      %p31 = scmp.ge.s32.totalorder %s30, 2
      %s32 = scalar_select %p31, 0, %s30
      %s33 = ssub.s32 %s20, %s32
      %s34 = ssub.s32 %s21, %s28
      %s35 = sor.u32 %s33, %s34
      %p36 = scmp.eq.s32.totalorder %s35, 0
      %s38 = sadd.s32 %s37, 1
      %s39 = scalar_select %p36, %s37, %s38
      %p42 = pneg %p36
      %p43 = scmp.eq.s32.totalorder %s13, 3
      %p44 = por %p42, %p43
      %p45 = scmp.ne.s32.totalorder %s37, %s40
      %p46 = scmp.eq.s32.totalorder %s13, 0
      %p47 = por %p45, %p46
      %p48 = scmp.ne.s32.totalorder %s37, %s40
      %p49 = scmp.eq.s32.totalorder %s18, 3
      %p50 = por %p48, %p49
      %p51 = scmp.ne.s32.totalorder %s40, %s41
      %p52 = scmp.eq.s32.totalorder %s18, 0
      %p53 = por %p51, %p52
      %p54 = scmp.ne.s32.totalorder %s40, %s41
      %p55 = scmp.eq.s32.totalorder %s19, 3
      %p56 = por %p54, %p55
      %p58 = scmp.ne.s32.totalorder %s41, %s57
      %p59 = scmp.eq.s32.totalorder %s19, 0
      %p60 = por %p58, %p59
      %s61 = ssub.s32 %s20, %s32
      %s62 = ssub.s32 %s21, %s28
      %s63 = sor.u32 %s61, %s62
      %p64 = scmp.eq.s32.totalorder %s63, 0
      %s66 = sadd.s32 %s65, 1
      %s67 = scalar_select %p64, %s65, %s66
      %p70 = pneg %p64
      %p71 = scmp.eq.s32.totalorder %s13, 3
      %p72 = por %p70, %p71
      %p73 = scmp.ne.s32.totalorder %s65, %s68
      %p74 = scmp.eq.s32.totalorder %s13, 0
      %p75 = por %p73, %p74
      %p76 = scmp.ne.s32.totalorder %s65, %s68
      %p77 = scmp.eq.s32.totalorder %s18, 3
      %p78 = por %p76, %p77
      %p79 = scmp.ne.s32.totalorder %s68, %s69
      %p80 = scmp.eq.s32.totalorder %s18, 0
      %p81 = por %p79, %p80
      %p82 = scmp.ne.s32.totalorder %s68, %s69
      %p83 = scmp.eq.s32.totalorder %s19, 3
      %p84 = por %p82, %p83
      %p86 = scmp.ne.s32.totalorder %s69, %s85
      %p87 = scmp.eq.s32.totalorder %s19, 0
      %p88 = por %p86, %p87
      %p89 = scmp.le.s32.totalorder 1, %s13
      %p90 = scmp.lt.s32.totalorder %s13, 5
      %p91 = pnand %p89, %p90
      %p92 = pneg %p91
      // Predicated region
      $region9: #{tpu_custom_call.1} parent=5 // pred_check
        _
      $region10: #{tpu_custom_call.1} parent=5 // pred_check_branch
        %94 = sbr.rel (%p91) target = $region12
      $region11: #{tpu_custom_call.1} parent=5 // pred_region
        %s95 = ssub.s32 %s13, 1
      $region12: #{tpu_custom_call.1} parent=5 // pred_fallthru
        _
      %p96 = scmp.lt.s32.totalorder %s13, 4
      // Predicated region
      $region13: #{tpu_custom_call.1} parent=5 // pred_check
        %p97 = pneg %p96
      $region14: #{tpu_custom_call.1} parent=5 // pred_check_branch
        %99 = sbr.rel (%p97) target = $region16
      $region15: #{tpu_custom_call.1} parent=5 // pred_region
        // Predicated region
        $region17: #{tpu_custom_call.1} parent=15 // pred_check
          %p100 = pneg %p47
        $region18: #{tpu_custom_call.1} parent=15 // pred_check_branch
          %102 = sbr.rel (%p100) target = $region20
        $region19: #{tpu_custom_call.1} parent=15 // pred_region
          %s103 = sand.u32 %s37, 1
          %s104 = scalar_lea.sflag [#allocation3], %s103
          %s105 = sand.u32 %s37, 1
          %s106 = smul.addr %s105, 4
          %s107 = scalar_lea.vmem [#allocation2], %s106
          %s109 = ssub.s32 64, 64
          %110 = vsyncadd %s104, %s109
          %s111 = smul.addr %s21, 2
          %s112 = smul.addr %s20, 4
          %s113 = sadd.s32 %s111, %s112
          %s114 = smul.addr %s113, 32
          %s115 = scalar_lea.hbm %s0, %s114
          %s117 = sshll.u32 %s107, 4
          %s118 = int_to_ptr.vmem [resolvable:$true] %s117
          %120 = dma.hbm_to_vmem [thread:$0]  %s115, 64, %s118, %s104
        $region20: #{tpu_custom_call.1} parent=15 // pred_fallthru
          _
      $region16: #{tpu_custom_call.1} parent=5 // pred_fallthru
        _
      %p121 = scmp.le.s32.totalorder 1, %s13
      %p122 = scmp.lt.s32.totalorder %s13, 5
      %p123 = pnand %p121, %p122
      %p124 = pneg %p123
      // Predicated region
      $region21: #{tpu_custom_call.1} parent=5 // pred_check
        _
      $region22: #{tpu_custom_call.1} parent=5 // pred_check_branch
        %126 = sbr.rel (%p123) target = $region24
      $region23: #{tpu_custom_call.1} parent=5 // pred_region
        %s127 = ssub.s32 %s13, 1
        %s128 = sand.u32 %s40, 1
        %s129 = scalar_lea.sflag [#allocation3], %s128
        %s130 = sand.u32 %s40, 1
        %s131 = smul.addr %s130, 4
        %s132 = scalar_lea.vmem [#allocation2], %s131
        // Predicated region
        $region25: #{tpu_custom_call.1} parent=23 // pred_check
          %p133 = pneg %p53
        $region26: #{tpu_custom_call.1} parent=23 // pred_check_branch
          %135 = sbr.rel (%p133) target = $region28
        $region27: #{tpu_custom_call.1} parent=23 // pred_region
          %136 = dma.done %s129, 64
        $region28: #{tpu_custom_call.1} parent=23 // pred_fallthru
          _
        %s137 = sand.u32 %s40, 1
        %s138 = scalar_lea.sflag [#allocation3], %s137
        %s139 = sand.u32 %s40, 1
        %s140 = smul.addr %s139, 4
        %s141 = scalar_lea.vmem [#allocation2], %s140
        %p142 = pneg %p53
        %p143 = pneg %p50
        %p144 = pneg %p81
        %p145 = pneg %p78
        %s146 = sand.u32 %s68, 1
        %s147 = scalar_lea.sflag [#allocation4], %s146
        %s148 = sand.u32 %s68, 1
        %s149 = smul.addr %s148, 4
        %s150 = scalar_lea.vmem [#allocation5], %s149
        %s151 = smul.u32 2, %s23
        %v152 = vld [vmem:[%s132] sm:$0xf]
        %153 = vst [vmem:[%s150] sm:$0xf] %v152
        %s154 = sand.u32 %s68, 1
        %s155 = scalar_lea.sflag [#allocation4], %s154
        %s156 = sand.u32 %s68, 1
        %s157 = smul.addr %s156, 4
        %s158 = scalar_lea.vmem [#allocation5], %s157
        // Predicated region
        $region29: #{tpu_custom_call.1} parent=23 // pred_check
          %p159 = pneg %p78
        $region30: #{tpu_custom_call.1} parent=23 // pred_check_branch
          %161 = sbr.rel (%p159) target = $region32
        $region31: #{tpu_custom_call.1} parent=23 // pred_region
          %s162 = smul.u32 2, %s23
          %s164 = ssub.s32 64, 64
          %165 = vsyncadd %s155, %s164
          %s166 = smul.addr %s22, 4
          %s167 = sadd.s32 %s162, %s166
          %s168 = smul.addr %s167, 32
          %s169 = scalar_lea.hbm %s1, %s168
          %s171 = sshll.u32 %s158, 4
          %s172 = int_to_ptr.vmem [resolvable:$true] %s171
          %174 = dma.vmem_to_hbm [thread:$0]  %s172, 64, %s169, %s155
        $region32: #{tpu_custom_call.1} parent=23 // pred_fallthru
          _
      $region24: #{tpu_custom_call.1} parent=5 // pred_fallthru
        _
      %p175 = scmp.le.s32.totalorder 2, %s13
      // Predicated region
      $region33: #{tpu_custom_call.1} parent=5 // pred_check
        %p176 = pneg %p175
      $region34: #{tpu_custom_call.1} parent=5 // pred_check_branch
        %178 = sbr.rel (%p176) target = $region36
      $region35: #{tpu_custom_call.1} parent=5 // pred_region
        %s179 = ssub.s32 %s13, 2
        // Predicated region
        $region37: #{tpu_custom_call.1} parent=35 // pred_check
          %p180 = pneg %p84
        $region38: #{tpu_custom_call.1} parent=35 // pred_check_branch
          %182 = sbr.rel (%p180) target = $region40
        $region39: #{tpu_custom_call.1} parent=35 // pred_region
          %s183 = sand.u32 %s69, 1
          %s184 = scalar_lea.sflag [#allocation4], %s183
          %s185 = sand.u32 %s69, 1
          %s186 = smul.addr %s185, 4
          %s187 = scalar_lea.vmem [#allocation5], %s186
          %188 = dma.done %s184, 64
        $region40: #{tpu_custom_call.1} parent=35 // pred_fallthru
          _
      $region36: #{tpu_custom_call.1} parent=5 // pred_fallthru
        _
    $region6: #{tpu_custom_call.1} parent=1 // loop_footer
      %s17 = sadd.s32 1, %s13
    $region7: #{tpu_custom_call.1} parent=1 // loop_footer_branch
      %12 = sbr.rel target = $region3
    $region8: #{tpu_custom_call.1} parent=1 // loop_exit
      _
    %189 = vsyncpa [#allocation3], 1
    %s190 = scalar_lea.sflag [#allocation3], 1
    %191 = vsyncpa %s190, 1
    %192 = vsyncpa [#allocation4], 1
    %s193 = scalar_lea.sflag [#allocation4], 1
    %194 = vsyncpa %s193, 1

</llo_original>
